<compile_context>
chip_gen: v7x
topology: tpu7x:2x2x1
jax: 0.10.0
libtpu: 0.0.40
codegen_flags: <defaults>
</compile_context>

<pallas_src>
import math
import jax
import jax.numpy as jnp
from jax.experimental import pallas as pl
from jax.experimental.pallas import tpu as pltpu


def _round_up(n, m):
    return ((n + m - 1) // m) * m


def torch_dist_sl_kernel(x_ref, w_ref, b_ref, out_ref):
    # x_ref: (tb, D), w_ref: (D, 2F), b_ref: (1, 2F), out_ref: (tb, 2F)
    x = x_ref[...].astype(jnp.float32)
    w = w_ref[...].astype(jnp.float32)
    b = b_ref[...].astype(jnp.float32)

    # Both parameter heads (loc, scale) fused into one matmul; weights are
    # already laid out (D, 2F), so no in-kernel transpose.
    y = jnp.dot(x, w, preferred_element_type=jnp.float32) + b  # (tb, 2F)

    # Constraint transforms (torch.distributions.transform_to):
    #   columns [0, F)   = loc   -> constraints.real      -> identity
    #   columns [F, 2F)  = scale -> constraints.positive  -> exp
    f = out_ref.shape[1] // 2
    out_ref[:, :f] = y[:, :f].astype(out_ref.dtype)
    out_ref[:, f:] = jnp.exp(y[:, f:]).astype(out_ref.dtype)


def torch_distribution_sl_forward(x, w, b, *, tb=2048):
    """Fused forward for TorchDistributionSL(Normal, ["loc", "scale"]).

    Args:
      x: (B, D) input (f32 or bf16).
      w: (D, 2F) stacked, pre-transposed weights: [:, :F] = loc head,
         [:, F:] = scale head.
      b: (1, 2F) stacked biases in the same column order.
      tb: batch tile (rows per grid step).  Sweep 1024-4096 for large B; it is
          clamped so a single block never far exceeds the batch.

    Returns:
      (B, 2F) f32 array: columns [:F] = loc, columns [F:] = scale (> 0).
    """
    B, D = x.shape
    D_w, PF = w.shape
    assert D_w == D
    assert b.shape == (1, PF)

    # Clamp the tile to the (sublane-aligned) batch so small batches don't get
    # an oversized block, and keep it a multiple of 8 for the (8, 128) rule.
    tb_eff = _round_up(max(8, min(tb, _round_up(B, 8))), 8)
    grid = (pl.cdiv(B, tb_eff),)

    return pl.pallas_call(
        torch_dist_sl_kernel,
        out_shape=jax.ShapeDtypeStruct((B, PF), jnp.float32),
        grid_spec=pltpu.PrefetchScalarGridSpec(
            num_scalar_prefetch=0,
            grid=grid,
            in_specs=[
                pl.BlockSpec((tb_eff, D), lambda i: (i, 0)),  # x tile over batch
                pl.BlockSpec((D, PF), lambda i: (0, 0)),      # weights (resident)
                pl.BlockSpec((1, PF), lambda i: (0, 0)),      # biases (resident)
            ],
            out_specs=pl.BlockSpec((tb_eff, PF), lambda i: (i, 0)),
        ),
        compiler_params=pltpu.CompilerParams(
            dimension_semantics=("parallel",),  # megacore-shard the batch axis
        ),
    )(x, w, b)


if __name__ == "__main__":
    # Small shapes consistent with the module: x: (batch, in_features),
    # out_features per parameter head, two heads (loc, scale) for Normal.
    batch, in_features, out_features = 8, 32, 1

    key = jax.random.PRNGKey(0)
    kx, kwl, kbl, kws, kbs = jax.random.split(key, 5)

    x = jax.random.normal(kx, (batch, in_features), dtype=jnp.float32)

    # Deterministic PyTorch-style nn.Linear init: U(-1/sqrt(in), 1/sqrt(in)).
    bound = 1.0 / math.sqrt(in_features)
    w_loc = jax.random.uniform(kwl, (out_features, in_features), jnp.float32, -bound, bound)
    b_loc = jax.random.uniform(kbl, (out_features,), jnp.float32, -bound, bound)
    w_scale = jax.random.uniform(kws, (out_features, in_features), jnp.float32, -bound, bound)
    b_scale = jax.random.uniform(kbs, (out_features,), jnp.float32, -bound, bound)

    # Pre-transpose + stack heads along the output (lane) axis: (D, 2F), (1, 2F).
    w = jnp.concatenate([w_loc, w_scale], axis=0).T        # (D, 2F)
    b = jnp.concatenate([b_loc, b_scale], axis=0)[None, :]  # (1, 2F)

    out = torch_distribution_sl_forward(x, w, b)
    out = jax.block_until_ready(out)

    # Pure-JAX reference check of the forward semantics.
    loc_ref = x @ w_loc.T + b_loc                           # (B, F)
    scale_ref = jnp.exp(x @ w_scale.T + b_scale)            # (B, F)
    ref = jnp.concatenate([loc_ref, scale_ref], axis=-1)    # (B, 2F)
    assert jnp.allclose(out, ref, rtol=1e-5, atol=1e-5), "mismatch vs reference"
    assert bool(jnp.all(out[:, out_features:] > 0)), "scale must be positive"

    # TODO(synk): the Independent(Normal(loc, scale), 1) Distribution wrapper has
    # no Pallas equivalent (it is a Python distribution object); the kernel
    # returns the distribution parameters [loc, scale] instead.
    print("KERNEL_OK")
</pallas_src>

<mosaic_0001>
module attributes {stable_mosaic.version = 11 : i64} {
  func.func @torch_dist_sl_kernel(%arg0: i32, %arg1: memref<8x32xf32, #tpu.memory_space<vmem>>, %arg2: memref<32x2xf32, #tpu.memory_space<vmem>>, %arg3: memref<1x2xf32, #tpu.memory_space<vmem>>, %arg4: memref<8x2xf32, #tpu.memory_space<vmem>>) attributes {dimension_semantics = [#tpu.dimension_semantics<parallel>], iteration_bounds = array<i64: 1>, scalar_prefetch = 0 : i64, scratch_operands = 0 : i64, tpu.core_type = #tpu.core_type<tc>, window_params = [{transform_indices = @transform_0, window_bounds = array<i64: 8, 32>}, {pipeline_mode = #tpu.pipeline_mode<synchronous>, transform_indices = @transform_1, window_bounds = array<i64: 32, 2>}, {pipeline_mode = #tpu.pipeline_mode<synchronous>, transform_indices = @transform_2, window_bounds = array<i64: 1, 2>}, {transform_indices = @transform_3, window_bounds = array<i64: 8, 2>}]} {
    %c0 = arith.constant 0 : index
    %c0_0 = arith.constant 0 : index
    %0 = vector.load %arg1[%c0, %c0_0] : memref<8x32xf32, #tpu.memory_space<vmem>>, vector<8x32xf32>
    %c0_1 = arith.constant 0 : index
    %c0_2 = arith.constant 0 : index
    %1 = vector.load %arg2[%c0_1, %c0_2] : memref<32x2xf32, #tpu.memory_space<vmem>>, vector<32x2xf32>
    %c0_3 = arith.constant 0 : index
    %c0_4 = arith.constant 0 : index
    %2 = vector.load %arg3[%c0_3, %c0_4] : memref<1x2xf32, #tpu.memory_space<vmem>>, vector<1x2xf32>
    %cst = arith.constant dense<0.000000e+00> : vector<8x2xf32>
    %3 = tpu.matmul %0, %1, %cst {dimension_numbers = #tpu.dot_dimension_numbers<[1], [0], [0], [1], [0, 0, 1, 1], [], []>} : vector<8x32xf32>, vector<32x2xf32>, vector<8x2xf32> -> vector<8x2xf32>
    %4 = vector.broadcast %2 : vector<1x2xf32> to vector<8x2xf32>
    %5 = arith.addf %3, %4 : vector<8x2xf32>
    %6 = vector.extract_strided_slice %5 {offsets = [0, 0], sizes = [8, 1], strides = [1, 1]} : vector<8x2xf32> to vector<8x1xf32>
    %c0_5 = arith.constant 0 : index
    %c0_6 = arith.constant 0 : index
    %7 = vector.load %arg4[%c0_5, %c0_6] : memref<8x2xf32, #tpu.memory_space<vmem>>, vector<8x1xf32>
    tpu.vector_store %arg4[%c0_5, %c0_6], %6 {strides = array<i32>} : memref<8x2xf32, #tpu.memory_space<vmem>>, vector<8x1xf32>,
    %8 = vector.extract_strided_slice %5 {offsets = [0, 1], sizes = [8, 1], strides = [1, 1]} : vector<8x2xf32> to vector<8x1xf32>
    %9 = math.exp %8 : vector<8x1xf32>
    %c0_7 = arith.constant 0 : index
    %c1 = arith.constant 1 : index
    %10 = vector.load %arg4[%c0_7, %c1] : memref<8x2xf32, #tpu.memory_space<vmem>>, vector<8x1xf32>
    tpu.vector_store %arg4[%c0_7, %c1], %9 {strides = array<i32>} : memref<8x2xf32, #tpu.memory_space<vmem>>, vector<8x1xf32>,
    return
  }
  func.func @transform_0(%arg0: i32) -> (i32, i32) {
    %c0_i32 = arith.constant 0 : i32
    %c0_i32_0 = arith.constant 0 : i32
    return %arg0, %c0_i32 : i32, i32
  }
  func.func @transform_1(%arg0: i32) -> (i32, i32) {
    %c0_i32 = arith.constant 0 : i32
    %c0_i32_0 = arith.constant 0 : i32
    %c0_i32_1 = arith.constant 0 : i32
    return %c0_i32, %c0_i32_0 : i32, i32
  }
  func.func @transform_2(%arg0: i32) -> (i32, i32) {
    %c0_i32 = arith.constant 0 : i32
    %c0_i32_0 = arith.constant 0 : i32
    %c0_i32_1 = arith.constant 0 : i32
    return %c0_i32, %c0_i32_0 : i32, i32
  }
  func.func @transform_3(%arg0: i32) -> (i32, i32) {
    %c0_i32 = arith.constant 0 : i32
    %c0_i32_0 = arith.constant 0 : i32
    return %arg0, %c0_i32 : i32, i32
  }
}

</mosaic_0001>

<llo_original>
// kernel: tpu_custom_call.1
$region0: #{tpu_custom_call.1}
  #allocation0 [shape = 'u32[]', space=smem, size = 0x4, offset = 0x4, fixed_abs, tag = 'smem constant byte address 0x4 - core index']
  #allocation1 [shape = 'u32[144,128]{1,0:T(1,128)}', space=vmem, size = 0x12000, scoped, tag = 'internal scratch']
  %s0 = inlined_call_operand.vmem [shape: f32[8,32], index: 0, kind: input, shape index: {}]
  %s1 = inlined_call_operand.vmem [shape: f32[32,2], index: 1, kind: input, shape index: {}]
  %s2 = inlined_call_operand.vmem [shape: f32[1,2], index: 2, kind: input, shape index: {}]
  %s3 = inlined_call_operand.vmem [shape: f32[8,2], index: 3, kind: output, shape index: {}]
  %s4 = sld [smem:[#allocation0]]
  $region22: #{tpu_custom_call.1} parent=0
    _
  %s6 = ssub.s32 1, %s4
  %s7 = scalar_select 0, %s6, %s4
  // Predicated region
  $region2: #{tpu_custom_call.1} parent=0 // pred_check
    _
  $region3: #{tpu_custom_call.1} parent=0 // pred_check_branch
    %9 = sbr.rel (0) target = $region5
  $region4: #{tpu_custom_call.1} parent=0 // pred_region
    _
  $region5: #{tpu_custom_call.1} parent=0 // pred_fallthru
    _
  // Predicated region
  $region6: #{tpu_custom_call.1} parent=0 // pred_check
    _
  $region7: #{tpu_custom_call.1} parent=0 // pred_check_branch
    %11 = sbr.rel (0) target = $region9
  $region8: #{tpu_custom_call.1} parent=0 // pred_region
    _
  $region9: #{tpu_custom_call.1} parent=0 // pred_fallthru
    _
  // Predicated region
  $region10: #{tpu_custom_call.1} parent=0 // pred_check
    _
  $region11: #{tpu_custom_call.1} parent=0 // pred_check_branch
    %13 = sbr.rel (0) target = $region13
  $region12: #{tpu_custom_call.1} parent=0 // pred_region
    _
  $region13: #{tpu_custom_call.1} parent=0 // pred_fallthru
    _
  %v14 = vld [vmem:[%s0] sm:$0xff]
  %v15 = vld [vmem:[%s1] sm:$0xff]
  %v16 = vld [vmem:[%s1 + $0x8] sm:$0xff]
  %v17 = vld [vmem:[%s1 + $0x10] sm:$0xff]
  %v18 = vld [vmem:[%s1 + $0x18] sm:$0xff]
  %v19 = vld [vmem:[%s2] sm:$0x1]
  %v21 = vlaneseq
  %v22 = vshrl.u32 %v21, 7
  %v23 = vsub.s32 0, %v22
  %v24 = vrot.slane %v19, %v23
  %vm26 = vcmask 261120
  %v28 = vsel %vm26, %v14, 0
  %30 = vmatprep.subr.mxu0 0.0
  %31 = vmatpush1.msra.mxu0 %v15
  %32 = vmatprep.subr.mxu0 0.0
  %33 = vmatpush1.msra.mxu0 %v16
  %34 = vmatprep.subr.mxu0 0.0
  %35 = vmatpush1.msra.mxu0 %v17
  %36 = vmatprep.subr.mxu0 0.0
  %37 = vmatpush1.msra.mxu0 %v18
  %38 = vmatprep.subr.mxu0 0.0
  %39 = vmatpush1.msra.mxu0 0.0
  %40 = vmatprep.subr.mxu0 0.0
  %41 = vmatpush1.msra.mxu0 0.0
  %42 = vmatprep.subr.mxu0 0.0
  %43 = vmatpush1.msra.mxu0 0.0
  %44 = vmatprep.subr.mxu0 0.0
  %45 = vmatpush1.msra.mxu0 0.0
  %46 = vmatprep.subr.mxu0 0.0
  %47 = vmatpush1.msra.mxu0 0.0
  %48 = vmatprep.subr.mxu0 0.0
  %49 = vmatpush1.msra.mxu0 0.0
  %50 = vmatprep.subr.mxu0 0.0
  %51 = vmatpush1.msra.mxu0 0.0
  %52 = vmatprep.subr.mxu0 0.0
  %53 = vmatpush1.msra.mxu0 0.0
  %54 = vmatprep.subr.mxu0 0.0
  %55 = vmatpush1.msra.mxu0 0.0
  %56 = vmatprep.subr.mxu0 0.0
  %57 = vmatpush1.msra.mxu0 0.0
  %58 = vmatprep.subr.mxu0 0.0
  %59 = vmatpush1.msra.mxu0 0.0
  %60 = vmatprep.subr.mxu0 0.0
  %61 = vmatpush1.msra.mxu0 0.0
  %62 = vmatprep.subr.mxu0 0.0
  %63 = vmatpush1.msra.mxu0 0.0
  %64 = vmatprep.subr.mxu0 0.0
  %65 = vmatpush1.msra.mxu0 0.0
  %66 = vmatprep.subr.mxu0 0.0
  %67 = vmatpush1.msra.mxu0 0.0
  %68 = vmatprep.subr.mxu0 0.0
  %69 = vmatpush1.msra.mxu0 0.0
  %70 = vmatprep.subr.mxu0 0.0
  %71 = vmatpush1.msra.mxu0 0.0
  %72 = vmatprep.subr.mxu0 0.0
  %73 = vmatpush1.msra.mxu0 0.0
  %74 = vmatprep.subr.mxu0 0.0
  %75 = vmatpush1.msra.mxu0 0.0
  %76 = vmatprep.subr.mxu0 0.0
  %77 = vmatpush1.msra.mxu0 0.0
  %78 = vmatprep.subr.mxu0 0.0
  %79 = vmatpush1.msra.mxu0 0.0
  %80 = vmatprep.subr.mxu0 0.0
  %81 = vmatpush1.msra.mxu0 0.0
  %82 = vmatprep.subr.mxu0 0.0
  %83 = vmatpush1.msra.mxu0 0.0
  %84 = vmatprep.subr.mxu0 0.0
  %85 = vmatpush1.msra.mxu0 0.0
  %86 = vmatprep.subr.mxu0 0.0
  %87 = vmatpush1.msra.mxu0 0.0
  %88 = vmatprep.subr.mxu0 0.0
  %89 = vmatpush1.msra.mxu0 0.0
  %90 = vmatprep.subr.mxu0 0.0
  %91 = vmatpush1.msra.mxu0 0.0
  %92 = vmatprep.subr.mxu0 0.0
  %93 = vmatpush1.msra.mxu0 0.0
  %94 = vmatprep.mubr.f32.mxu0 0.0
  %95 = vmatmul.mubr.f32.gmra.mrb[0].mxu0 %v28
  %v96 = vpop.f32.mrb[0].mxu0
  %v97 = vadd.f32 %v24, %v96
  %v98 = vpop.f32.mrb[0].mxu0
  %99 = vdwg.mxu0
  %vm100 = vcmask 7168
  %101 = vst.msk [vmem:[%s3] sm:$0xff] %vm100, %v97
  %v102 = vmul.f32 %v97, 1.442695
  %v103 = vpow.pop %v102
  %vm104 = vcmask 15368
  %105 = vst.msk [vmem:[%s3] sm:$0xff] %vm104, %v103
  // Predicated region
  $region14: #{tpu_custom_call.1} parent=0 // pred_check
    _
  $region15: #{tpu_custom_call.1} parent=0 // pred_check_branch
    %107 = sbr.rel (0) target = $region17
  $region16: #{tpu_custom_call.1} parent=0 // pred_region
    _
  $region17: #{tpu_custom_call.1} parent=0 // pred_fallthru
    _
  // Predicated region
  $region18: #{tpu_custom_call.1} parent=0 // pred_check
    _
  $region19: #{tpu_custom_call.1} parent=0 // pred_check_branch
    %109 = sbr.rel (0) target = $region21
  $region20: #{tpu_custom_call.1} parent=0 // pred_region
    _
  $region21: #{tpu_custom_call.1} parent=0 // pred_fallthru
    _

</llo_original>
